<compile_context>
chip_gen: v6e
topology: v6e:2x2x1
jax: 0.10.0
libtpu: 0.0.40
codegen_flags: <defaults>
</compile_context>

<pallas_src>
import functools

import jax
import jax.numpy as jnp
from jax.experimental import pallas as pl
from jax.experimental.pallas import tpu as pltpu


def _block_t_kernel(x_ref, w_ref, b_ref, wf_ref, bf_ref, o_ref, *, frames, cb2):
    # x_ref:  (M, V*Cin)      bf16, M = samples_per_block*T, row = n*T + t,
    #                         lanes joint-major: [v0: Cin | v1: Cin | ...]
    # w_ref:  (3, V*Cin, V*2Cb) bf16 block-diagonal per-tap weights; the two
    #                         branches are stacked inside each joint's block
    #                         (tap 0 -> x[t-1], tap 1 -> x[t], tap 2 -> x[t+1])
    # b_ref:  (1, V*2Cb)      f32 folded-BN branch bias, tiled per joint
    # wf_ref: (V*2Cb, V*Cout) bf16 block-diagonal fusion (1x1 conv) weight
    # bf_ref: (1, V*Cout)     f32 folded-BN fusion bias, tiled per joint
    # o_ref:  (M, V*Cout)     f32 lane-dense flat output
    x = x_ref[...]
    m = x.shape[0]
    c2 = w_ref.shape[2]
    cb = cb2 // 2

    # Frame-index / branch-lane masks, hoisted and built exactly once
    # (JAX does not CSE broadcast_in_dim).  (row mod T) makes the boundary
    # handling correct even when several samples share the row axis.
    frame = jax.lax.broadcasted_iota(jnp.int32, (m, c2), 0) % frames
    lane = jax.lax.broadcasted_iota(jnp.int32, (m, c2), 1) % cb2
    first_frame = frame == 0
    last_frame = frame == frames - 1
    is_branch0 = lane < cb

    up = m - 1  # roll by -1 row (row r <- row r+1) as a positive shift

    def branch_mix(p):
        # Branch 0 runs on x, branch 1 on xm[t] = x[min(t+1, T-1)] - x[t].
        # The channel matmul commutes with row shifts, so
        #   dot(xm, w) = clamp_roll(dot(x, w)) - dot(x, w)
        # and no shifted copies of the input are ever materialized.
        clamped = jnp.where(last_frame, p, pltpu.roll(p, shift=up, axis=0))
        return jnp.where(is_branch0, p, clamped - p)

    # k=3 temporal conv, accumulated tap by tap so at most two (M, V*2Cb) f32
    # slabs are live at any point (vreg pressure / VMEM residency).
    # Center tap (+ folded-BN bias).
    y = branch_mix(jnp.dot(x, w_ref[1], preferred_element_type=jnp.float32))
    y = y + b_ref[...]
    # x[t-1] tap: shift rows down one frame; frame 0 sees the conv zero pad.
    z = branch_mix(jnp.dot(x, w_ref[0], preferred_element_type=jnp.float32))
    y = y + jnp.where(first_frame, 0.0, pltpu.roll(z, shift=1, axis=0))
    # x[t+1] tap: shift rows up one frame; frame T-1 sees the conv zero pad.
    z = branch_mix(jnp.dot(x, w_ref[2], preferred_element_type=jnp.float32))
    y = y + jnp.where(last_frame, 0.0, pltpu.roll(z, shift=up, axis=0))

    y = jnp.maximum(y, 0.0)  # (M, V*2Cb): per joint [relu(branch0)|relu(branch1)]

    # Fusion 1x1 conv + folded-BN bias.  The branch concat is already implicit
    # in the stacked layout; output stays lane-dense and is stored flat
    # (no in-kernel reshape -> no sublane-regrouping copy, unmasked stores).
    out = jnp.dot(y.astype(wf_ref.dtype), wf_ref[...],
                  preferred_element_type=jnp.float32) + bf_ref[...]
    o_ref[...] = out.astype(o_ref.dtype)


def block_t_forward(x_ntvc, w0, b0, w1, b1, wf, bf, *, samples_per_block=None):
    N, T, V, Cin = x_ntvc.shape
    Cb = w0.shape[-1]
    Cb2 = 2 * Cb
    Cout = wf.shape[-1]

    if samples_per_block is None:
        # Keep 2 parallel grid steps when possible (feeds both v7x TensorCores).
        # On single-TC chips (v5e/v6e) pass samples_per_block=N to fold the
        # whole batch into one step and pay the per-step overhead once.
        samples_per_block = N // 2 if (N >= 2 and N % 2 == 0) else 1
    assert N % samples_per_block == 0, "samples_per_block must divide N"
    steps = N // samples_per_block
    M = samples_per_block * T

    # Branch weights stacked on the output-channel axis, then V folded into the
    # lane axis via block-diagonal weights so every kernel op is lane-dense.
    # Only worthwhile at small channel widths (Cin, Cout <= ~16); the V-fold
    # redundancy in FLOPs is negligible at these dims.
    eye_v = jnp.eye(V, dtype=jnp.float32)
    w01 = jnp.concatenate([w0, w1], axis=-1)                       # (3, Cin, 2Cb)
    w_big = jnp.stack(
        [jnp.kron(eye_v, w01[k]) for k in range(3)]
    ).astype(jnp.bfloat16)                                         # (3, V*Cin, V*2Cb)
    b_big = jnp.tile(jnp.concatenate([b0, b1], axis=-1),
                     (1, V)).astype(jnp.float32)                   # (1, V*2Cb)
    wf_big = jnp.kron(eye_v, wf).astype(jnp.bfloat16)              # (V*2Cb, V*Cout)
    bf_big = jnp.tile(bf, (1, V)).astype(jnp.float32)              # (1, V*Cout)

    # (N, T, V, Cin) -> (N*T, V*Cin): free contiguous view on HBM.
    x_flat = x_ntvc.reshape(N * T, V * Cin).astype(jnp.bfloat16)

    flops = 2 * N * T * (3 * (V * Cin) * (V * Cb2) + (V * Cb2) * (V * Cout))
    bytes_accessed = (x_flat.size * 2 + w_big.size * 2 + wf_big.size * 2
                      + b_big.size * 4 + bf_big.size * 4
                      + N * T * V * Cout * 4)

    out_flat = pl.pallas_call(
        functools.partial(_block_t_kernel, frames=T, cb2=Cb2),
        out_shape=jax.ShapeDtypeStruct((N * T, V * Cout), jnp.float32),
        grid_spec=pltpu.PrefetchScalarGridSpec(
            num_scalar_prefetch=0,
            grid=(steps,),
            in_specs=[
                pl.BlockSpec((M, V * Cin), lambda i: (i, 0)),
                pl.BlockSpec((3, V * Cin, V * Cb2), lambda i: (0, 0, 0)),
                pl.BlockSpec((1, V * Cb2), lambda i: (0, 0)),
                pl.BlockSpec((V * Cb2, V * Cout), lambda i: (0, 0)),
                pl.BlockSpec((1, V * Cout), lambda i: (0, 0)),
            ],
            out_specs=pl.BlockSpec((M, V * Cout), lambda i: (i, 0)),
        ),
        compiler_params=pltpu.CompilerParams(
            dimension_semantics=("parallel",),
        ),
        cost_estimate=pl.CostEstimate(
            flops=flops, transcendentals=0, bytes_accessed=bytes_accessed),
    )(x_flat, w_big, b_big, wf_big, bf_big)

    # (N*T, V*Cout) -> (N, T, V, Cout): free contiguous view.
    return out_flat.reshape(N, T, V, Cout)


def init_params(key, in_channels, out_channels, eps=1e-5):
    """Deterministic parameter init mirroring conv_init / bn_init shapes."""
    branch = out_channels // 2
    k0, k1, k2 = jax.random.split(key, 3)

    def kaiming(k, shape, fan_out):
        # kaiming_normal_, mode='fan_out': std = sqrt(2 / fan_out)
        return jax.random.normal(k, shape, jnp.float32) * jnp.sqrt(2.0 / fan_out)

    # torch conv weight (Cb, Cin, 3, 1) -> stored here as (3, Cin, Cb)
    w0 = kaiming(k0, (3, in_channels, branch), branch * 3 * 1)
    w1 = kaiming(k1, (3, in_channels, branch), branch * 3 * 1)
    # fusion conv (Cout, 2*Cb, 1, 1) -> (2*Cb, Cout)
    wf = kaiming(k2, (2 * branch, out_channels), out_channels * 1 * 1)

    def fold_bn(w, c):
        gamma = jnp.ones((c,), jnp.float32)      # bn_init(bn, 1)
        beta = jnp.zeros((c,), jnp.float32)
        mean = jnp.zeros((c,), jnp.float32)      # default running stats
        var = jnp.ones((c,), jnp.float32)
        scale = gamma / jnp.sqrt(var + eps)
        bias = beta - mean * scale
        return w * scale, bias.reshape(1, c)

    w0f, b0 = fold_bn(w0, branch)
    w1f, b1 = fold_bn(w1, branch)
    wff, bf = fold_bn(wf, out_channels)
    return w0f, b0, w1f, b1, wff, bf


def ref_forward(x, w0, b0, w1, b1, wf, bf):
    """Pure-JAX reference of BlockT.forward (channels-last layout)."""

    def tconv3(inp, w, b):
        xp = jnp.concatenate([jnp.zeros_like(inp[:, :1]), inp[:, :-1]], axis=1)
        xn = jnp.concatenate([inp[:, 1:], jnp.zeros_like(inp[:, :1])], axis=1)
        y = (jnp.einsum("ntvc,cd->ntvd", xp, w[0])
             + jnp.einsum("ntvc,cd->ntvd", inp, w[1])
             + jnp.einsum("ntvc,cd->ntvd", xn, w[2]))
        return y + b.reshape(1, 1, 1, -1)

    y0 = jax.nn.relu(tconv3(x, w0, b0))
    xm = jnp.concatenate([x[:, 1:], x[:, -1:]], axis=1) - x
    y1 = jax.nn.relu(tconv3(xm, w1, b1))
    ycat = jnp.concatenate([y0, y1], axis=-1)
    return jnp.einsum("ntvc,cd->ntvd", ycat, wf) + bf.reshape(1, 1, 1, -1)


if __name__ == "__main__":
    key = jax.random.PRNGKey(0)
    kx, kp = jax.random.split(key)

    # PyTorch-equivalent input: x of shape (N, C, T, V)
    N, Cin, T, V = 2, 4, 16, 16
    Cout = 8
    x_nchw = jax.random.normal(kx, (N, Cin, T, V), jnp.float32)
    x = jnp.transpose(x_nchw, (0, 2, 3, 1))        # -> (N, T, V, C)

    params = init_params(kp, Cin, Cout)

    out = block_t_forward(x, *params)
    out = jax.block_until_ready(out)

    # Reference fed with bf16-rounded operands (the kernel feeds the MXU bf16
    # inputs with f32 accumulation); the remaining drift comes from the bf16
    # cast of the fusion-matmul activation, absorbed by the tolerance below.
    def _r(a):
        return a.astype(jnp.bfloat16).astype(jnp.float32)

    w0, b0, w1, b1, wf, bf = params
    ref = ref_forward(_r(x), _r(w0), b0, _r(w1), b1, _r(wf), bf)

    assert out.shape == (N, T, V, Cout), out.shape
    max_err = float(jnp.max(jnp.abs(out - ref)))
    assert jnp.allclose(out, ref, rtol=5e-2, atol=5e-2), max_err

    print("KERNEL_OK")
</pallas_src>

<mosaic_0001>
module attributes {stable_mosaic.version = 11 : i64} {
  func.func @_block_t_kernel(%arg0: i32, %arg1: memref<16x64xbf16, #tpu.memory_space<vmem>>, %arg2: memref<3x64x128xbf16, #tpu.memory_space<vmem>>, %arg3: memref<1x128xf32, #tpu.memory_space<vmem>>, %arg4: memref<128x128xbf16, #tpu.memory_space<vmem>>, %arg5: memref<1x128xf32, #tpu.memory_space<vmem>>, %arg6: memref<16x128xf32, #tpu.memory_space<vmem>>) attributes {dimension_semantics = [#tpu.dimension_semantics<parallel>], iteration_bounds = array<i64: 2>, scalar_prefetch = 0 : i64, scratch_operands = 0 : i64, tpu.core_type = #tpu.core_type<tc>, window_params = [{transform_indices = @transform_0, window_bounds = array<i64: 16, 64>}, {pipeline_mode = #tpu.pipeline_mode<synchronous>, transform_indices = @transform_1, window_bounds = array<i64: 3, 64, 128>}, {pipeline_mode = #tpu.pipeline_mode<synchronous>, transform_indices = @transform_2, window_bounds = array<i64: 1, 128>}, {pipeline_mode = #tpu.pipeline_mode<synchronous>, transform_indices = @transform_3, window_bounds = array<i64: 128, 128>}, {pipeline_mode = #tpu.pipeline_mode<synchronous>, transform_indices = @transform_4, window_bounds = array<i64: 1, 128>}, {transform_indices = @transform_5, window_bounds = array<i64: 16, 128>}]} {
    %c0 = arith.constant 0 : index
    %c0_0 = arith.constant 0 : index
    %0 = vector.load %arg1[%c0, %c0_0] : memref<16x64xbf16, #tpu.memory_space<vmem>>, vector<16x64xbf16>
    %1 = tpu.iota {dimensions = array<i32: 0>} : vector<16x128xi32>
    %c16_i32 = arith.constant 16 : i32
    %c0_i32 = arith.constant 0 : i32
    %2 = arith.cmpi eq, %c16_i32, %c0_i32 : i32
    %c1_i32 = arith.constant 1 : i32
    %3 = arith.select %2, %c1_i32, %c16_i32 : i32
    %4 = vector.broadcast %3 : i32 to vector<16x128xi32>
    %5 = arith.remsi %1, %4 : vector<16x128xi32>
    %c0_i32_1 = arith.constant 0 : i32
    %6 = vector.broadcast %c0_i32_1 : i32 to vector<16x128xi32>
    %7 = arith.cmpi ne, %5, %6 : vector<16x128xi32>
    %c0_i32_2 = arith.constant 0 : i32
    %8 = vector.broadcast %c0_i32_2 : i32 to vector<16x128xi32>
    %9 = arith.cmpi slt, %5, %8 : vector<16x128xi32>
    %c0_i32_3 = arith.constant 0 : i32
    %10 = arith.cmpi slt, %3, %c0_i32_3 : i32
    %11 = vector.broadcast %10 : i1 to vector<16x128xi1>
    %12 = vector.broadcast %11 : vector<16x128xi1> to vector<16x128xi1>
    %13 = arith.xori %9, %12 : vector<16x128xi1>
    %14 = arith.andi %13, %7 : vector<16x128xi1>
    %15 = vector.broadcast %3 : i32 to vector<16x128xi32>
    %16 = arith.addi %5, %15 : vector<16x128xi32>
    %17 = arith.select %14, %16, %5 : vector<16x128xi1>, vector<16x128xi32>
    %18 = tpu.iota {dimensions = array<i32: 1>} : vector<16x128xi32>
    %c8_i32 = arith.constant 8 : i32
    %c0_i32_4 = arith.constant 0 : i32
    %19 = arith.cmpi eq, %c8_i32, %c0_i32_4 : i32
    %c1_i32_5 = arith.constant 1 : i32
    %20 = arith.select %19, %c1_i32_5, %c8_i32 : i32
    %21 = vector.broadcast %20 : i32 to vector<16x128xi32>
    %22 = arith.remsi %18, %21 : vector<16x128xi32>
    %c0_i32_6 = arith.constant 0 : i32
    %23 = vector.broadcast %c0_i32_6 : i32 to vector<16x128xi32>
    %24 = arith.cmpi ne, %22, %23 : vector<16x128xi32>
    %c0_i32_7 = arith.constant 0 : i32
    %25 = vector.broadcast %c0_i32_7 : i32 to vector<16x128xi32>
    %26 = arith.cmpi slt, %22, %25 : vector<16x128xi32>
    %c0_i32_8 = arith.constant 0 : i32
    %27 = arith.cmpi slt, %20, %c0_i32_8 : i32
    %28 = vector.broadcast %27 : i1 to vector<16x128xi1>
    %29 = vector.broadcast %28 : vector<16x128xi1> to vector<16x128xi1>
    %30 = arith.xori %26, %29 : vector<16x128xi1>
    %31 = arith.andi %30, %24 : vector<16x128xi1>
    %32 = vector.broadcast %20 : i32 to vector<16x128xi32>
    %33 = arith.addi %22, %32 : vector<16x128xi32>
    %34 = arith.select %31, %33, %22 : vector<16x128xi1>, vector<16x128xi32>
    %c0_i32_9 = arith.constant 0 : i32
    %35 = vector.broadcast %c0_i32_9 : i32 to vector<16x128xi32>
    %36 = arith.cmpi eq, %17, %35 : vector<16x128xi32>
    %c15_i32 = arith.constant 15 : i32
    %37 = vector.broadcast %c15_i32 : i32 to vector<16x128xi32>
    %38 = arith.cmpi eq, %17, %37 : vector<16x128xi32>
    %c4_i32 = arith.constant 4 : i32
    %39 = vector.broadcast %c4_i32 : i32 to vector<16x128xi32>
    %40 = arith.cmpi slt, %34, %39 : vector<16x128xi32>
    %c1 = arith.constant 1 : index
    %c0_10 = arith.constant 0 : index
    %c0_11 = arith.constant 0 : index
    %41 = vector.load %arg2[%c1, %c0_10, %c0_11] : memref<3x64x128xbf16, #tpu.memory_space<vmem>>, vector<1x64x128xbf16>
    %42 = vector.shape_cast %41 : vector<1x64x128xbf16> to vector<64x128xbf16>
    %cst = arith.constant dense<0.000000e+00> : vector<16x128xf32>
    %43 = tpu.matmul %0, %42, %cst {dimension_numbers = #tpu.dot_dimension_numbers<[1], [0], [0], [1], [0, 0, 1, 1], [], []>} : vector<16x64xbf16>, vector<64x128xbf16>, vector<16x128xf32> -> vector<16x128xf32>
    %c15_i32_12 = arith.constant 15 : i32
    %44 = tpu.dynamic_rotate %43 by %c15_i32_12 dim 0 : vector<16x128xf32>, i32 -> vector<16x128xf32>
    %45 = arith.select %38, %43, %44 : vector<16x128xi1>, vector<16x128xf32>
    %46 = arith.subf %45, %43 : vector<16x128xf32>
    %47 = arith.select %40, %43, %46 : vector<16x128xi1>, vector<16x128xf32>
    %c0_13 = arith.constant 0 : index
    %c0_14 = arith.constant 0 : index
    %48 = vector.load %arg3[%c0_13, %c0_14] : memref<1x128xf32, #tpu.memory_space<vmem>>, vector<1x128xf32>
    %49 = vector.broadcast %48 : vector<1x128xf32> to vector<16x128xf32>
    %50 = arith.addf %47, %49 : vector<16x128xf32>
    %c0_15 = arith.constant 0 : index
    %c0_16 = arith.constant 0 : index
    %c0_17 = arith.constant 0 : index
    %51 = vector.load %arg2[%c0_15, %c0_16, %c0_17] : memref<3x64x128xbf16, #tpu.memory_space<vmem>>, vector<1x64x128xbf16>
    %52 = vector.shape_cast %51 : vector<1x64x128xbf16> to vector<64x128xbf16>
    %cst_18 = arith.constant dense<0.000000e+00> : vector<16x128xf32>
    %53 = tpu.matmul %0, %52, %cst_18 {dimension_numbers = #tpu.dot_dimension_numbers<[1], [0], [0], [1], [0, 0, 1, 1], [], []>} : vector<16x64xbf16>, vector<64x128xbf16>, vector<16x128xf32> -> vector<16x128xf32>
    %c15_i32_19 = arith.constant 15 : i32
    %54 = tpu.dynamic_rotate %53 by %c15_i32_19 dim 0 : vector<16x128xf32>, i32 -> vector<16x128xf32>
    %55 = arith.select %38, %53, %54 : vector<16x128xi1>, vector<16x128xf32>
    %56 = arith.subf %55, %53 : vector<16x128xf32>
    %57 = arith.select %40, %53, %56 : vector<16x128xi1>, vector<16x128xf32>
    %c1_i32_20 = arith.constant 1 : i32
    %58 = tpu.dynamic_rotate %57 by %c1_i32_20 dim 0 : vector<16x128xf32>, i32 -> vector<16x128xf32>
    %cst_21 = arith.constant 0.000000e+00 : f32
    %59 = vector.broadcast %cst_21 : f32 to vector<16x128xf32>
    %60 = arith.select %36, %59, %58 : vector<16x128xi1>, vector<16x128xf32>
    %61 = arith.addf %50, %60 : vector<16x128xf32>
    %c2 = arith.constant 2 : index
    %c0_22 = arith.constant 0 : index
    %c0_23 = arith.constant 0 : index
    %62 = vector.load %arg2[%c2, %c0_22, %c0_23] : memref<3x64x128xbf16, #tpu.memory_space<vmem>>, vector<1x64x128xbf16>
    %63 = vector.shape_cast %62 : vector<1x64x128xbf16> to vector<64x128xbf16>
    %cst_24 = arith.constant dense<0.000000e+00> : vector<16x128xf32>
    %64 = tpu.matmul %0, %63, %cst_24 {dimension_numbers = #tpu.dot_dimension_numbers<[1], [0], [0], [1], [0, 0, 1, 1], [], []>} : vector<16x64xbf16>, vector<64x128xbf16>, vector<16x128xf32> -> vector<16x128xf32>
    %c15_i32_25 = arith.constant 15 : i32
    %65 = tpu.dynamic_rotate %64 by %c15_i32_25 dim 0 : vector<16x128xf32>, i32 -> vector<16x128xf32>
    %66 = arith.select %38, %64, %65 : vector<16x128xi1>, vector<16x128xf32>
    %67 = arith.subf %66, %64 : vector<16x128xf32>
    %68 = arith.select %40, %64, %67 : vector<16x128xi1>, vector<16x128xf32>
    %c15_i32_26 = arith.constant 15 : i32
    %69 = tpu.dynamic_rotate %68 by %c15_i32_26 dim 0 : vector<16x128xf32>, i32 -> vector<16x128xf32>
    %cst_27 = arith.constant 0.000000e+00 : f32
    %70 = vector.broadcast %cst_27 : f32 to vector<16x128xf32>
    %71 = arith.select %38, %70, %69 : vector<16x128xi1>, vector<16x128xf32>
    %72 = arith.addf %61, %71 : vector<16x128xf32>
    %cst_28 = arith.constant 0.000000e+00 : f32
    %73 = vector.broadcast %cst_28 : f32 to vector<16x128xf32>
    %74 = arith.maximumf %72, %73 : vector<16x128xf32>
    %75 = arith.truncf %74 : vector<16x128xf32> to vector<16x128xbf16>
    %c0_29 = arith.constant 0 : index
    %c0_30 = arith.constant 0 : index
    %76 = vector.load %arg4[%c0_29, %c0_30] : memref<128x128xbf16, #tpu.memory_space<vmem>>, vector<128x128xbf16>
    %cst_31 = arith.constant dense<0.000000e+00> : vector<16x128xf32>
    %77 = tpu.matmul %75, %76, %cst_31 {dimension_numbers = #tpu.dot_dimension_numbers<[1], [0], [0], [1], [0, 0, 1, 1], [], []>} : vector<16x128xbf16>, vector<128x128xbf16>, vector<16x128xf32> -> vector<16x128xf32>
    %c0_32 = arith.constant 0 : index
    %c0_33 = arith.constant 0 : index
    %78 = vector.load %arg5[%c0_32, %c0_33] : memref<1x128xf32, #tpu.memory_space<vmem>>, vector<1x128xf32>
    %79 = vector.broadcast %78 : vector<1x128xf32> to vector<16x128xf32>
    %80 = arith.addf %77, %79 : vector<16x128xf32>
    %c0_34 = arith.constant 0 : index
    %c0_35 = arith.constant 0 : index
    %81 = vector.load %arg6[%c0_34, %c0_35] : memref<16x128xf32, #tpu.memory_space<vmem>>, vector<16x128xf32>
    tpu.vector_store %arg6[%c0_34, %c0_35], %80 {strides = array<i32>} : memref<16x128xf32, #tpu.memory_space<vmem>>, vector<16x128xf32>,
    return
  }
  func.func @transform_0(%arg0: i32) -> (i32, i32) {
    %c0_i32 = arith.constant 0 : i32
    %c0_i32_0 = arith.constant 0 : i32
    return %arg0, %c0_i32 : i32, i32
  }
  func.func @transform_1(%arg0: i32) -> (i32, i32, i32) {
    %c0_i32 = arith.constant 0 : i32
    %c0_i32_0 = arith.constant 0 : i32
    %c0_i32_1 = arith.constant 0 : i32
    %c0_i32_2 = arith.constant 0 : i32
    return %c0_i32, %c0_i32_0, %c0_i32_1 : i32, i32, i32
  }
  func.func @transform_2(%arg0: i32) -> (i32, i32) {
    %c0_i32 = arith.constant 0 : i32
    %c0_i32_0 = arith.constant 0 : i32
    %c0_i32_1 = arith.constant 0 : i32
    return %c0_i32, %c0_i32_0 : i32, i32
  }
  func.func @transform_3(%arg0: i32) -> (i32, i32) {
    %c0_i32 = arith.constant 0 : i32
    %c0_i32_0 = arith.constant 0 : i32
    %c0_i32_1 = arith.constant 0 : i32
    return %c0_i32, %c0_i32_0 : i32, i32
  }
  func.func @transform_4(%arg0: i32) -> (i32, i32) {
    %c0_i32 = arith.constant 0 : i32
    %c0_i32_0 = arith.constant 0 : i32
    %c0_i32_1 = arith.constant 0 : i32
    return %c0_i32, %c0_i32_0 : i32, i32
  }
  func.func @transform_5(%arg0: i32) -> (i32, i32) {
    %c0_i32 = arith.constant 0 : i32
    %c0_i32_0 = arith.constant 0 : i32
    return %arg0, %c0_i32 : i32, i32
  }
}

</mosaic_0001>

<llo_original>
// kernel: tpu_custom_call.1
$region0: #{tpu_custom_call.1}
  #allocation0 [shape = 'u32[]', space=smem, size = 0x4, offset = 0x4, fixed_abs, tag = 'smem constant byte address 0x4 - core index']
  #allocation1 [shape = 'u32[144,128]{1,0:T(1,128)}', space=vmem, size = 0x12000, scoped, tag = 'internal scratch']
  %s0 = inlined_call_operand.hbm [shape: bf16[32,64], index: 0, kind: input, shape index: {}]
  %s1 = inlined_call_operand.hbm [shape: bf16[3,64,128], index: 1, kind: input, shape index: {}]
  %s2 = inlined_call_operand.vmem [shape: f32[1,128], index: 2, kind: input, shape index: {}]
  %s3 = inlined_call_operand.hbm [shape: bf16[128,128], index: 3, kind: input, shape index: {}]
  %s4 = inlined_call_operand.vmem [shape: f32[1,128], index: 4, kind: input, shape index: {}]
  %s5 = inlined_call_operand.hbm [shape: f32[32,128], index: 5, kind: output, shape index: {}]
  %s6 = sld [smem:[#allocation0]]
  $region65: #{tpu_custom_call.1} parent=0
    _
  %s8 = ssub.s32 1, %s6
  %s9 = scalar_select 0, %s8, %s6
  $region1: #{tpu_custom_call.1} parent=0
    #allocation2 [shape = 'u8[8192]{0}', space=vmem, size = 0x2000, scoped, tag = 'input window, operand 0']
    #allocation3 [shape = 's32[2]{0}', space=sflag, size = 0x8, scoped, tag = 'scoped memory for tpu_custom_call.1']
    #allocation4 [shape = 's32[2]{0}', space=sflag, size = 0x8, scoped, tag = 'scoped memory for tpu_custom_call.1']
    #allocation5 [shape = 'u8[49152]{0}', space=vmem, size = 0xc000, scoped, tag = 'input window, operand 1, single buffered']
    #allocation6 [shape = 's32[1]{0}', space=sflag, size = 0x4, scoped, tag = 'scoped memory for tpu_custom_call.1']
    #allocation7 [shape = 'u8[32768]{0}', space=vmem, size = 0x8000, scoped, tag = 'input window, operand 3, single buffered']
    #allocation8 [shape = 'u8[16384]{0}', space=vmem, size = 0x4000, scoped, tag = 'output window, operand 0']
    %10 = vsyncpa [#allocation3], 0
    %s11 = scalar_lea.sflag [#allocation3], 1
    %12 = vsyncpa %s11, 0
    %13 = vsyncpa [#allocation6], 0
    %14 = vsyncpa [#allocation4], 0
    %s15 = scalar_lea.sflag [#allocation4], 1
    %16 = vsyncpa %s15, 0
    loop: start=0, step=1, limit=4
    $region2: #{tpu_custom_call.1} parent=1 // loop_pre_header
      _
    $region3: #{tpu_custom_call.1} parent=1 // loop_header
      %s18 = sphi 0, %s22
      %p19 = scmp.ge.s32.totalorder %s18, 4
      %s28 = sphi 0, %s30
      %s31 = sphi 0, %s28
      %s32 = sphi 0, %s31
      %s48 = sphi 0, %s32
      %s52 = sphi 0, %s52
      %s54 = sphi 0, %s52
      %s55 = sphi 0, %s54
      %s69 = sphi 0, %s55
      %s73 = sphi 0, %s73
      %s75 = sphi 0, %s73
      %s76 = sphi 0, %s75
      %s90 = sphi 0, %s76
      %s94 = sphi 0, %s94
      %s96 = sphi 0, %s94
      %s97 = sphi 0, %s96
      %s111 = sphi 0, %s97
      %s115 = sphi 0, %s115
      %s117 = sphi 0, %s115
      %s118 = sphi 0, %s117
      %s132 = sphi 0, %s118
      %s138 = sphi 0, %s140
      %s141 = sphi 0, %s138
      %s142 = sphi 0, %s141
      %s158 = sphi 0, %s142
    $region4: #{tpu_custom_call.1} parent=1 // loop_header_branch
      %21 = sbr.rel (%p19) target = $region8
    $region5: #{tpu_custom_call.1} parent=1 // loop_body
      %s23 = ssub.s32 %s18, 1
      %s24 = ssub.s32 %s18, 2
      %s25 = sadd.s32 %s18, 1
      %s26 = ssub.s32 %s18, %s25
      %p27 = scmp.eq.s32.totalorder %s26, 0
      %s29 = sadd.s32 %s28, 1
      %s30 = scalar_select %p27, %s28, %s29
      %p33 = pneg %p27
      %p34 = scmp.eq.s32.totalorder %s18, 1
      %p35 = por %p33, %p34
      %p36 = scmp.ne.s32.totalorder %s28, %s31
      %p37 = scmp.eq.s32.totalorder %s18, 0
      %p38 = por %p36, %p37
      %p39 = scmp.ne.s32.totalorder %s28, %s31
      %p40 = scmp.eq.s32.totalorder %s23, 1
      %p41 = por %p39, %p40
      %p42 = scmp.ne.s32.totalorder %s31, %s32
      %p43 = scmp.eq.s32.totalorder %s23, 0
      %p44 = por %p42, %p43
      %p45 = scmp.ne.s32.totalorder %s31, %s32
      %p46 = scmp.eq.s32.totalorder %s24, 1
      %p47 = por %p45, %p46
      %p49 = scmp.ne.s32.totalorder %s32, %s48
      %p50 = scmp.eq.s32.totalorder %s24, 0
      %p51 = por %p49, %p50
      %s53 = sadd.s32 %s52, 1
      %p56 = scmp.eq.s32.totalorder %s18, 1
      %p57 = scmp.ne.s32.totalorder %s52, %s54
      %p58 = scmp.eq.s32.totalorder %s18, 0
      %p59 = por %p57, %p58
      %p60 = scmp.ne.s32.totalorder %s52, %s54
      %p61 = scmp.eq.s32.totalorder %s23, 1
      %p62 = por %p60, %p61
      %p63 = scmp.ne.s32.totalorder %s54, %s55
      %p64 = scmp.eq.s32.totalorder %s23, 0
      %p65 = por %p63, %p64
      %p66 = scmp.ne.s32.totalorder %s54, %s55
      %p67 = scmp.eq.s32.totalorder %s24, 1
      %p68 = por %p66, %p67
      %p70 = scmp.ne.s32.totalorder %s55, %s69
      %p71 = scmp.eq.s32.totalorder %s24, 0
      %p72 = por %p70, %p71
      %s74 = sadd.s32 %s73, 1
      %p77 = scmp.eq.s32.totalorder %s18, 1
      %p78 = scmp.ne.s32.totalorder %s73, %s75
      %p79 = scmp.eq.s32.totalorder %s18, 0
      %p80 = por %p78, %p79
      %p81 = scmp.ne.s32.totalorder %s73, %s75
      %p82 = scmp.eq.s32.totalorder %s23, 1
      %p83 = por %p81, %p82
      %p84 = scmp.ne.s32.totalorder %s75, %s76
      %p85 = scmp.eq.s32.totalorder %s23, 0
      %p86 = por %p84, %p85
      %p87 = scmp.ne.s32.totalorder %s75, %s76
      %p88 = scmp.eq.s32.totalorder %s24, 1
      %p89 = por %p87, %p88
      %p91 = scmp.ne.s32.totalorder %s76, %s90
      %p92 = scmp.eq.s32.totalorder %s24, 0
      %p93 = por %p91, %p92
      %s95 = sadd.s32 %s94, 1
      %p98 = scmp.eq.s32.totalorder %s18, 1
      %p99 = scmp.ne.s32.totalorder %s94, %s96
      %p100 = scmp.eq.s32.totalorder %s18, 0
      %p101 = por %p99, %p100
      %p102 = scmp.ne.s32.totalorder %s94, %s96
      %p103 = scmp.eq.s32.totalorder %s23, 1
      %p104 = por %p102, %p103
      %p105 = scmp.ne.s32.totalorder %s96, %s97
      %p106 = scmp.eq.s32.totalorder %s23, 0
      %p107 = por %p105, %p106
      %p108 = scmp.ne.s32.totalorder %s96, %s97
      %p109 = scmp.eq.s32.totalorder %s24, 1
      %p110 = por %p108, %p109
      %p112 = scmp.ne.s32.totalorder %s97, %s111
      %p113 = scmp.eq.s32.totalorder %s24, 0
      %p114 = por %p112, %p113
      %s116 = sadd.s32 %s115, 1
      %p119 = scmp.eq.s32.totalorder %s18, 1
      %p120 = scmp.ne.s32.totalorder %s115, %s117
      %p121 = scmp.eq.s32.totalorder %s18, 0
      %p122 = por %p120, %p121
      %p123 = scmp.ne.s32.totalorder %s115, %s117
      %p124 = scmp.eq.s32.totalorder %s23, 1
      %p125 = por %p123, %p124
      %p126 = scmp.ne.s32.totalorder %s117, %s118
      %p127 = scmp.eq.s32.totalorder %s23, 0
      %p128 = por %p126, %p127
      %p129 = scmp.ne.s32.totalorder %s117, %s118
      %p130 = scmp.eq.s32.totalorder %s24, 1
      %p131 = por %p129, %p130
      %p133 = scmp.ne.s32.totalorder %s118, %s132
      %p134 = scmp.eq.s32.totalorder %s24, 0
      %p135 = por %p133, %p134
      %s136 = ssub.s32 %s18, %s25
      %p137 = scmp.eq.s32.totalorder %s136, 0
      %s139 = sadd.s32 %s138, 1
      %s140 = scalar_select %p137, %s138, %s139
      %p143 = pneg %p137
      %p144 = scmp.eq.s32.totalorder %s18, 1
      %p145 = por %p143, %p144
      %p146 = scmp.ne.s32.totalorder %s138, %s141
      %p147 = scmp.eq.s32.totalorder %s18, 0
      %p148 = por %p146, %p147
      %p149 = scmp.ne.s32.totalorder %s138, %s141
      %p150 = scmp.eq.s32.totalorder %s23, 1
      %p151 = por %p149, %p150
      %p152 = scmp.ne.s32.totalorder %s141, %s142
      %p153 = scmp.eq.s32.totalorder %s23, 0
      %p154 = por %p152, %p153
      %p155 = scmp.ne.s32.totalorder %s141, %s142
      %p156 = scmp.eq.s32.totalorder %s24, 1
      %p157 = por %p155, %p156
      %p159 = scmp.ne.s32.totalorder %s142, %s158
      %p160 = scmp.eq.s32.totalorder %s24, 0
      %p161 = por %p159, %p160
      %p162 = scmp.le.s32.totalorder 1, %s18
      %p163 = scmp.lt.s32.totalorder %s18, 3
      %p164 = pnand %p162, %p163
      %p165 = pneg %p164
      // Predicated region
      $region9: #{tpu_custom_call.1} parent=5 // pred_check
        _
      $region10: #{tpu_custom_call.1} parent=5 // pred_check_branch
        %167 = sbr.rel (%p164) target = $region12
      $region11: #{tpu_custom_call.1} parent=5 // pred_region
        %s168 = ssub.s32 %s18, 1
        // Predicated region
        $region13: #{tpu_custom_call.1} parent=11 // pred_check
          %p169 = pneg %p65
        $region14: #{tpu_custom_call.1} parent=11 // pred_check_branch
          %171 = sbr.rel (%p169) target = $region16
        $region15: #{tpu_custom_call.1} parent=11 // pred_region
          %s173 = ssub.s32 1536, 1536
          %174 = vsyncadd [#allocation6], %s173
          %s175 = sshll.u32 [#allocation5], 4
          %s176 = int_to_ptr.vmem [resolvable:$true] %s175
          %181 = dma.hbm_to_vmem [thread:$0]  %s1, 1536, %s176, [#allocation6], 64, 64, 4
        $region16: #{tpu_custom_call.1} parent=11 // pred_fallthru
          _
        // Predicated region
        $region17: #{tpu_custom_call.1} parent=11 // pred_check
          %p182 = pneg %p86
        $region18: #{tpu_custom_call.1} parent=11 // pred_check_branch
          %184 = sbr.rel (%p182) target = $region20
        $region19: #{tpu_custom_call.1} parent=11 // pred_region
          _
        $region20: #{tpu_custom_call.1} parent=11 // pred_fallthru
          _
        // Predicated region
        $region21: #{tpu_custom_call.1} parent=11 // pred_check
          %p185 = pneg %p107
        $region22: #{tpu_custom_call.1} parent=11 // pred_check_branch
          %187 = sbr.rel (%p185) target = $region24
        $region23: #{tpu_custom_call.1} parent=11 // pred_region
          %s189 = ssub.s32 1024, 1024
          %190 = vsyncadd [#allocation6], %s189
          %s191 = sshll.u32 [#allocation7], 4
          %s192 = int_to_ptr.vmem [resolvable:$true] %s191
          %197 = dma.hbm_to_vmem [thread:$0]  %s3, 1024, %s192, [#allocation6], 64, 64, 4
        $region24: #{tpu_custom_call.1} parent=11 // pred_fallthru
          _
        // Predicated region
        $region25: #{tpu_custom_call.1} parent=11 // pred_check
          %p198 = pneg %p128
        $region26: #{tpu_custom_call.1} parent=11 // pred_check_branch
          %200 = sbr.rel (%p198) target = $region28
        $region27: #{tpu_custom_call.1} parent=11 // pred_region
          _
        $region28: #{tpu_custom_call.1} parent=11 // pred_fallthru
          _
      $region12: #{tpu_custom_call.1} parent=5 // pred_fallthru
        _
      %p201 = scmp.lt.s32.totalorder %s18, 2
      // Predicated region
      $region29: #{tpu_custom_call.1} parent=5 // pred_check
        %p202 = pneg %p201
      $region30: #{tpu_custom_call.1} parent=5 // pred_check_branch
        %204 = sbr.rel (%p202) target = $region32
      $region31: #{tpu_custom_call.1} parent=5 // pred_region
        // Predicated region
        $region33: #{tpu_custom_call.1} parent=31 // pred_check
          %p205 = pneg %p38
        $region34: #{tpu_custom_call.1} parent=31 // pred_check_branch
          %207 = sbr.rel (%p205) target = $region36
        $region35: #{tpu_custom_call.1} parent=31 // pred_region
          %s208 = sand.u32 %s28, 1
          %s209 = scalar_lea.sflag [#allocation3], %s208
          %s210 = sand.u32 %s28, 1
          %s211 = smul.addr %s210, 8
          %s212 = scalar_lea.vmem [#allocation2], %s211
          %s213 = smul.u32 2, %s18
          %s215 = ssub.s32 128, 128
          %216 = vsyncadd %s209, %s215
          %s217 = smul.addr %s213, 64
          %s218 = scalar_lea.hbm %s0, %s217
          %s219 = sshll.u32 %s212, 4
          %s220 = int_to_ptr.vmem [resolvable:$true] %s219
          %225 = dma.hbm_to_vmem [thread:$0]  %s218, 128, %s220, %s209, 64, 64, 4
        $region36: #{tpu_custom_call.1} parent=31 // pred_fallthru
          _
      $region32: #{tpu_custom_call.1} parent=5 // pred_fallthru
        _
      %p226 = scmp.le.s32.totalorder 1, %s18
      %p227 = scmp.lt.s32.totalorder %s18, 3
      %p228 = pnand %p226, %p227
      %p229 = pneg %p228
      // Predicated region
      $region37: #{tpu_custom_call.1} parent=5 // pred_check
        _
      $region38: #{tpu_custom_call.1} parent=5 // pred_check_branch
        %231 = sbr.rel (%p228) target = $region40
      $region39: #{tpu_custom_call.1} parent=5 // pred_region
        %s232 = ssub.s32 %s18, 1
        %s233 = sand.u32 %s31, 1
        %s234 = scalar_lea.sflag [#allocation3], %s233
        %s235 = sand.u32 %s31, 1
        %s236 = smul.addr %s235, 8
        %s237 = scalar_lea.vmem [#allocation2], %s236
        // Predicated region
        $region41: #{tpu_custom_call.1} parent=39 // pred_check
          %p238 = pneg %p44
        $region42: #{tpu_custom_call.1} parent=39 // pred_check_branch
          %240 = sbr.rel (%p238) target = $region44
        $region43: #{tpu_custom_call.1} parent=39 // pred_region
          %241 = dma.done %s234, 128
        $region44: #{tpu_custom_call.1} parent=39 // pred_fallthru
          _
        // Predicated region
        $region45: #{tpu_custom_call.1} parent=39 // pred_check
          %p242 = pneg %p65
        $region46: #{tpu_custom_call.1} parent=39 // pred_check_branch
          %244 = sbr.rel (%p242) target = $region48
        $region47: #{tpu_custom_call.1} parent=39 // pred_region
          %245 = dma.done [#allocation6], 1536
        $region48: #{tpu_custom_call.1} parent=39 // pred_fallthru
          _
        // Predicated region
        $region49: #{tpu_custom_call.1} parent=39 // pred_check
          %p246 = pneg %p107
        $region50: #{tpu_custom_call.1} parent=39 // pred_check_branch
          %248 = sbr.rel (%p246) target = $region52
        $region51: #{tpu_custom_call.1} parent=39 // pred_region
          %249 = dma.done [#allocation6], 1024
        $region52: #{tpu_custom_call.1} parent=39 // pred_fallthru
          _
        %s250 = sand.u32 %s31, 1
        %s251 = scalar_lea.sflag [#allocation3], %s250
        %s252 = sand.u32 %s31, 1
        %s253 = smul.addr %s252, 8
        %s254 = scalar_lea.vmem [#allocation2], %s253
        %p255 = pneg %p44
        %p256 = pneg %p41
        %p257 = pneg %p65
        %p258 = pneg %p62
        %p259 = pneg %p86
        %p260 = pneg %p83
        %p261 = pneg %p107
        %p262 = pneg %p104
        %p263 = pneg %p128
        %p264 = pneg %p125
        %p265 = pneg %p154
        %p266 = pneg %p151
        %s267 = sand.u32 %s141, 1
        %s268 = scalar_lea.sflag [#allocation4], %s267
        %s269 = sand.u32 %s141, 1
        %s270 = smul.addr %s269, 16
        %s271 = scalar_lea.vmem [#allocation8], %s270
        %s272 = smul.u32 2, %s23
        %s273 = smul.u32 2, %s23
        %v275 = vld [vmem:[%s237] sm:$0xf]
        %v276 = vld [vmem:[%s237 + $0x4] sm:$0xf]
        %v277 = vlaneseq
        %v278 = vshrl.u32 %v277, 7
        %v279 = vadd.s32 %v278, 8
        %vm280 = vcmp.lt.s32.totalorder %v278, 0
        %v281 = vsub.s32 0, %v278
        %v282 = vsel %vm280, %v281, %v278
        %v283 = vshrl.u32 %v282, 4
        %v284 = vand.u32 %v282, 15
        %v285 = vsub.s32 0, %v284
        %v286 = vsel %vm280, %v285, %v284
        %vm287 = vcmp.lt.s32.totalorder %v279, 0
        %v288 = vsub.s32 0, %v279
        %v289 = vsel %vm287, %v288, %v279
        %v290 = vshrl.u32 %v289, 4
        %v291 = vand.u32 %v289, 15
        %v292 = vsub.s32 0, %v291
        %v293 = vsel %vm287, %v292, %v291
        %vm294 = vcmp.ne.s32.totalorder %v286, 0
        %vm295 = vcmp.ne.s32.totalorder %v293, 0
        %vm296 = vcmp.lt.s32.totalorder %v286, 0
        %vm297 = vcmp.lt.s32.totalorder %v293, 0
        %vm298 = vmand %vm296, %vm294
        %vm299 = vmand %vm297, %vm295
        %v300 = vadd.s32 %v286, 16
        %v301 = vadd.s32 %v293, 16
        %v302 = vsel %vm298, %v300, %v286
        %v303 = vsel %vm299, %v301, %v293
        %v304 = vlaneseq
        %v305 = vand.u32 %v304, 127
        %vm306 = vcmp.lt.s32.totalorder %v305, 0
        %v307 = vsub.s32 0, %v305
        %v308 = vsel %vm306, %v307, %v305
        %v309 = vshrl.u32 %v308, 3
        %v310 = vand.u32 %v308, 7
        %v311 = vsub.s32 0, %v310
        %v312 = vsel %vm306, %v311, %v310
        %vm313 = vcmp.ne.s32.totalorder %v312, 0
        %vm314 = vcmp.lt.s32.totalorder %v312, 0
        %vm315 = vmand %vm314, %vm313
        %v316 = vadd.s32 %v312, 8
        %v317 = vsel %vm315, %v316, %v312
        %vm318 = vcmp.eq.s32.totalorder %v302, 0
        %vm319 = vcmp.eq.s32.totalorder %v303, 0
        %vm320 = vcmp.eq.s32.totalorder %v302, 15
        %vm321 = vcmp.eq.s32.totalorder %v303, 15
        %vm322 = vcmp.lt.s32.totalorder %v317, 4
        %s323 = scalar_lea.vmem [#allocation5], 32
        %v324 = vld [vmem:[%s323] sm:$0xf]
        %v325 = vld [vmem:[%s323 + $0x4] sm:$0xf]
        %v326 = vld [vmem:[%s323 + $0x8] sm:$0xf]
        %v327 = vld [vmem:[%s323 + $0xc] sm:$0xf]
        %v328 = vld [vmem:[%s323 + $0x10] sm:$0xf]
        %v329 = vld [vmem:[%s323 + $0x14] sm:$0xf]
        %v330 = vld [vmem:[%s323 + $0x18] sm:$0xf]
        %v331 = vld [vmem:[%s323 + $0x1c] sm:$0xf]
        %v334 = vunpack.c.l.b16 %v275
        %v335 = vunpack.c.l.b16 %v276
        %v336 = vpack.c.b16 %v335, %v334
        %v345 = vunpack.c.l.b16 %v324
        %v346 = vunpack.c.l.b16 %v325
        %v347 = vunpack.c.l.b16 %v326
        %v348 = vunpack.c.l.b16 %v327
        %v349 = vunpack.c.l.b16 %v328
        %v350 = vunpack.c.l.b16 %v329
        %v351 = vunpack.c.l.b16 %v330
        %v352 = vunpack.c.l.b16 %v331
        %v353 = vpack.c.b16 %v346, %v345
        %v354 = vpack.c.b16 %v348, %v347
        %v355 = vpack.c.b16 %v350, %v349
        %v356 = vpack.c.b16 %v352, %v351
        %vm361 = vcmask 523264
        %v363 = vsel %vm361, %v336, 0
        %365 = vmatprep.subr.bf16.mxu0 0
        %366 = vmatpush1.bf16.msra.mxu0 0
        %367 = vmatprep.subr.bf16.mxu0 0
        %368 = vmatpush1.bf16.msra.mxu0 0
        %369 = vmatprep.subr.bf16.mxu0 0
        %370 = vmatpush1.bf16.msra.mxu0 0
        %371 = vmatprep.subr.bf16.mxu0 0
        %372 = vmatpush1.bf16.msra.mxu0 0
        %373 = vmatprep.subr.bf16.mxu0 0
        %374 = vmatpush1.bf16.msra.mxu0 %v356
        %375 = vmatprep.subr.bf16.mxu0 0
        %376 = vmatpush1.bf16.msra.mxu0 %v355
        %377 = vmatprep.subr.bf16.mxu0 0
        %378 = vmatpush1.bf16.msra.mxu0 %v354
        %379 = vmatprep.subr.bf16.mxu0 0
        %380 = vmatpush1.bf16.msra.mxu0 %v353
        %381 = vmatprep.subr.bf16.mxu0 0
        %382 = vmatpush2.bf16.msra.mxu0 0
        %383 = vmatprep.subr.bf16.mxu0 0
        %384 = vmatpush2.bf16.msra.mxu0 0
        %385 = vmatprep.subr.bf16.mxu0 0
        %386 = vmatpush2.bf16.msra.mxu0 0
        %387 = vmatprep.subr.bf16.mxu0 0
        %388 = vmatpush2.bf16.msra.mxu0 0
        %389 = vmatprep.subr.bf16.mxu0 0
        %390 = vmatpush2.bf16.msra.mxu0 0
        %391 = vmatprep.subr.bf16.mxu0 0
        %392 = vmatpush2.bf16.msra.mxu0 0
        %393 = vmatprep.subr.bf16.mxu0 0
        %394 = vmatpush2.bf16.msra.mxu0 0
        %395 = vmatprep.subr.bf16.mxu0 0
        %396 = vmatpush2.bf16.msra.mxu0 0
        %397 = vmatprep.mubr.bf16.mxu0 0
        %398 = vmatmul.mubr.bf16.gmra.mxu0 %v363
        %v399 = vpop.f32.mrf.mxu0
        %v400 = vadd.f32 0.0, %v399
        %v401 = vpop.f32.mrf.mxu0
        %v402 = vpop.f32.mrf.mxu0
        %v403 = vadd.f32 0.0, %v402
        %v404 = vpop.f32.mrf.mxu0
        %405 = vdwg.mxu0
        %v406 = vrot.slane %v400, 1
        %v407 = vrot.slane %v403, 1
        %vm408 = vcmp.lt.s32.totalorder %v278, 7
        %v409 = vsel %vm408, %v406, %v407
        %v410 = vsel %vm408, %v407, %v406
        %v411 = vsel %vm320, %v400, %v409
        %v412 = vsel %vm321, %v403, %v410
        %v413 = vsub.f32 %v411, %v400
        %v414 = vsub.f32 %v412, %v403
        %v415 = vsel %vm322, %v400, %v413
        %v416 = vsel %vm322, %v403, %v414
        %v417 = vld [vmem:[%s2] sm:$0x1]
        %v419 = vlaneseq
        %v420 = vshrl.u32 %v419, 7
        %v421 = vsub.s32 0, %v420
        %v422 = vrot.slane %v417, %v421
        %v424 = vadd.f32 %v415, %v422
        %v425 = vadd.f32 %v416, %v422
        %v426 = vld [vmem:[#allocation5] sm:$0xf]
        %v427 = vld [vmem:[#allocation5 + $0x4] sm:$0xf]
        %v428 = vld [vmem:[#allocation5 + $0x8] sm:$0xf]
        %v429 = vld [vmem:[#allocation5 + $0xc] sm:$0xf]
        %v430 = vld [vmem:[#allocation5 + $0x10] sm:$0xf]
        %v431 = vld [vmem:[#allocation5 + $0x14] sm:$0xf]
        %v432 = vld [vmem:[#allocation5 + $0x18] sm:$0xf]
        %v433 = vld [vmem:[#allocation5 + $0x1c] sm:$0xf]
        %v442 = vunpack.c.l.b16 %v426
        %v443 = vunpack.c.l.b16 %v427
        %v444 = vunpack.c.l.b16 %v428
        %v445 = vunpack.c.l.b16 %v429
        %v446 = vunpack.c.l.b16 %v430
        %v447 = vunpack.c.l.b16 %v431
        %v448 = vunpack.c.l.b16 %v432
        %v449 = vunpack.c.l.b16 %v433
        %v450 = vpack.c.b16 %v443, %v442
        %v451 = vpack.c.b16 %v445, %v444
        %v452 = vpack.c.b16 %v447, %v446
        %v453 = vpack.c.b16 %v449, %v448
        %458 = vmatprep.subr.bf16.mxu0 0
        %459 = vmatpush1.bf16.msra.mxu0 0
        %460 = vmatprep.subr.bf16.mxu0 0
        %461 = vmatpush1.bf16.msra.mxu0 0
        %462 = vmatprep.subr.bf16.mxu0 0
        %463 = vmatpush1.bf16.msra.mxu0 0
        %464 = vmatprep.subr.bf16.mxu0 0
        %465 = vmatpush1.bf16.msra.mxu0 0
        %466 = vmatprep.subr.bf16.mxu0 0
        %467 = vmatpush1.bf16.msra.mxu0 %v453
        %468 = vmatprep.subr.bf16.mxu0 0
        %469 = vmatpush1.bf16.msra.mxu0 %v452
        %470 = vmatprep.subr.bf16.mxu0 0
        %471 = vmatpush1.bf16.msra.mxu0 %v451
        %472 = vmatprep.subr.bf16.mxu0 0
        %473 = vmatpush1.bf16.msra.mxu0 %v450
        %474 = vmatprep.subr.bf16.mxu0 0
        %475 = vmatpush2.bf16.msra.mxu0 0
        %476 = vmatprep.subr.bf16.mxu0 0
        %477 = vmatpush2.bf16.msra.mxu0 0
        %478 = vmatprep.subr.bf16.mxu0 0
        %479 = vmatpush2.bf16.msra.mxu0 0
        %480 = vmatprep.subr.bf16.mxu0 0
        %481 = vmatpush2.bf16.msra.mxu0 0
        %482 = vmatprep.subr.bf16.mxu0 0
        %483 = vmatpush2.bf16.msra.mxu0 0
        %484 = vmatprep.subr.bf16.mxu0 0
        %485 = vmatpush2.bf16.msra.mxu0 0
        %486 = vmatprep.subr.bf16.mxu0 0
        %487 = vmatpush2.bf16.msra.mxu0 0
        %488 = vmatprep.subr.bf16.mxu0 0
        %489 = vmatpush2.bf16.msra.mxu0 0
        %490 = vmatprep.mubr.bf16.mxu0 0
        %491 = vmatmul.mubr.bf16.gmra.mxu0 %v363
        %v492 = vpop.f32.mrf.mxu0
        %v493 = vadd.f32 0.0, %v492
        %v494 = vpop.f32.mrf.mxu0
        %v495 = vpop.f32.mrf.mxu0
        %v496 = vadd.f32 0.0, %v495
        %v497 = vpop.f32.mrf.mxu0
        %498 = vdwg.mxu0
        %v499 = vrot.slane %v493, 1
        %v500 = vrot.slane %v496, 1
        %v501 = vsel %vm408, %v499, %v500
        %v502 = vsel %vm408, %v500, %v499
        %v503 = vsel %vm320, %v493, %v501
        %v504 = vsel %vm321, %v496, %v502
        %v505 = vsub.f32 %v503, %v493
        %v506 = vsub.f32 %v504, %v496
        %v507 = vsel %vm322, %v493, %v505
        %v508 = vsel %vm322, %v496, %v506
        %v509 = vrot.slane %v507, 7
        %v510 = vrot.slane %v508, 7
        %vm511 = vcmp.lt.s32.totalorder %v278, 1
        %v512 = vsel %vm511, %v509, %v510
        %v513 = vsel %vm511, %v510, %v509
        %v514 = vsel %vm318, 0.0, %v513
        %v515 = vsel %vm319, 0.0, %v512
        %v516 = vadd.f32 %v424, %v514
        %v517 = vadd.f32 %v425, %v515
        %s518 = scalar_lea.vmem [#allocation5], 64
        %v519 = vld [vmem:[%s518] sm:$0xf]
        %v520 = vld [vmem:[%s518 + $0x4] sm:$0xf]
        %v521 = vld [vmem:[%s518 + $0x8] sm:$0xf]
        %v522 = vld [vmem:[%s518 + $0xc] sm:$0xf]
        %v523 = vld [vmem:[%s518 + $0x10] sm:$0xf]
        %v524 = vld [vmem:[%s518 + $0x14] sm:$0xf]
        %v525 = vld [vmem:[%s518 + $0x18] sm:$0xf]
        %v526 = vld [vmem:[%s518 + $0x1c] sm:$0xf]
        %v535 = vunpack.c.l.b16 %v519
        %v536 = vunpack.c.l.b16 %v520
        %v537 = vunpack.c.l.b16 %v521
        %v538 = vunpack.c.l.b16 %v522
        %v539 = vunpack.c.l.b16 %v523
        %v540 = vunpack.c.l.b16 %v524
        %v541 = vunpack.c.l.b16 %v525
        %v542 = vunpack.c.l.b16 %v526
        %v543 = vpack.c.b16 %v536, %v535
        %v544 = vpack.c.b16 %v538, %v537
        %v545 = vpack.c.b16 %v540, %v539
        %v546 = vpack.c.b16 %v542, %v541
        %551 = vmatprep.subr.bf16.mxu0 0
        %552 = vmatpush1.bf16.msra.mxu0 0
        %553 = vmatprep.subr.bf16.mxu0 0
        %554 = vmatpush1.bf16.msra.mxu0 0
        %555 = vmatprep.subr.bf16.mxu0 0
        %556 = vmatpush1.bf16.msra.mxu0 0
        %557 = vmatprep.subr.bf16.mxu0 0
        %558 = vmatpush1.bf16.msra.mxu0 0
        %559 = vmatprep.subr.bf16.mxu0 0
        %560 = vmatpush1.bf16.msra.mxu0 %v546
        %561 = vmatprep.subr.bf16.mxu0 0
        %562 = vmatpush1.bf16.msra.mxu0 %v545
        %563 = vmatprep.subr.bf16.mxu0 0
        %564 = vmatpush1.bf16.msra.mxu0 %v544
        %565 = vmatprep.subr.bf16.mxu0 0
        %566 = vmatpush1.bf16.msra.mxu0 %v543
        %567 = vmatprep.subr.bf16.mxu0 0
        %568 = vmatpush2.bf16.msra.mxu0 0
        %569 = vmatprep.subr.bf16.mxu0 0
        %570 = vmatpush2.bf16.msra.mxu0 0
        %571 = vmatprep.subr.bf16.mxu0 0
        %572 = vmatpush2.bf16.msra.mxu0 0
        %573 = vmatprep.subr.bf16.mxu0 0
        %574 = vmatpush2.bf16.msra.mxu0 0
        %575 = vmatprep.subr.bf16.mxu0 0
        %576 = vmatpush2.bf16.msra.mxu0 0
        %577 = vmatprep.subr.bf16.mxu0 0
        %578 = vmatpush2.bf16.msra.mxu0 0
        %579 = vmatprep.subr.bf16.mxu0 0
        %580 = vmatpush2.bf16.msra.mxu0 0
        %581 = vmatprep.subr.bf16.mxu0 0
        %582 = vmatpush2.bf16.msra.mxu0 0
        %583 = vmatprep.mubr.bf16.mxu0 0
        %584 = vmatmul.mubr.bf16.gmra.mxu0 %v363
        %v585 = vpop.f32.mrf.mxu0
        %v586 = vadd.f32 0.0, %v585
        %v587 = vpop.f32.mrf.mxu0
        %v588 = vpop.f32.mrf.mxu0
        %v589 = vadd.f32 0.0, %v588
        %v590 = vpop.f32.mrf.mxu0
        %591 = vdwg.mxu0
        %v592 = vrot.slane %v586, 1
        %v593 = vrot.slane %v589, 1
        %v594 = vsel %vm408, %v592, %v593
        %v595 = vsel %vm408, %v593, %v592
        %v596 = vsel %vm320, %v586, %v594
        %v597 = vsel %vm321, %v589, %v595
        %v598 = vsub.f32 %v596, %v586
        %v599 = vsub.f32 %v597, %v589
        %v600 = vsel %vm322, %v586, %v598
        %v601 = vsel %vm322, %v589, %v599
        %v602 = vrot.slane %v600, 1
        %v603 = vrot.slane %v601, 1
        %v604 = vsel %vm408, %v602, %v603
        %v605 = vsel %vm408, %v603, %v602
        %v606 = vsel %vm320, 0.0, %v604
        %v607 = vsel %vm321, 0.0, %v605
        %v608 = vadd.f32 %v516, %v606
        %v609 = vadd.f32 %v517, %v607
        %v610 = vmax.f32 %v608, 0.0
        %v611 = vmax.f32 %v609, 0.0
        %v612 = vpack.c.bf16 %v611, %v610
        %v613 = vld [vmem:[#allocation7] sm:$0xf]
        %v614 = vld [vmem:[#allocation7 + $0x4] sm:$0xf]
        %v615 = vld [vmem:[#allocation7 + $0x8] sm:$0xf]
        %v616 = vld [vmem:[#allocation7 + $0xc] sm:$0xf]
        %v617 = vld [vmem:[#allocation7 + $0x10] sm:$0xf]
        %v618 = vld [vmem:[#allocation7 + $0x14] sm:$0xf]
        %v619 = vld [vmem:[#allocation7 + $0x18] sm:$0xf]
        %v620 = vld [vmem:[#allocation7 + $0x1c] sm:$0xf]
        %v621 = vld [vmem:[#allocation7 + $0x20] sm:$0xf]
        %v622 = vld [vmem:[#allocation7 + $0x24] sm:$0xf]
        %v623 = vld [vmem:[#allocation7 + $0x28] sm:$0xf]
        %v624 = vld [vmem:[#allocation7 + $0x2c] sm:$0xf]
        %v625 = vld [vmem:[#allocation7 + $0x30] sm:$0xf]
        %v626 = vld [vmem:[#allocation7 + $0x34] sm:$0xf]
        %v627 = vld [vmem:[#allocation7 + $0x38] sm:$0xf]
        %v628 = vld [vmem:[#allocation7 + $0x3c] sm:$0xf]
        %v629 = vld [vmem:[%s4] sm:$0x1]
        %v631 = vlaneseq
        %v632 = vshrl.u32 %v631, 7
        %v633 = vsub.s32 0, %v632
        %v634 = vrot.slane %v629, %v633
        %v652 = vunpack.c.l.b16 %v613
        %v653 = vunpack.c.l.b16 %v614
        %v654 = vunpack.c.l.b16 %v615
        %v655 = vunpack.c.l.b16 %v616
        %v656 = vunpack.c.l.b16 %v617
        %v657 = vunpack.c.l.b16 %v618
        %v658 = vunpack.c.l.b16 %v619
        %v659 = vunpack.c.l.b16 %v620
        %v660 = vunpack.c.l.b16 %v621
        %v661 = vunpack.c.l.b16 %v622
        %v662 = vunpack.c.l.b16 %v623
        %v663 = vunpack.c.l.b16 %v624
        %v664 = vunpack.c.l.b16 %v625
        %v665 = vunpack.c.l.b16 %v626
        %v666 = vunpack.c.l.b16 %v627
        %v667 = vunpack.c.l.b16 %v628
        %v668 = vpack.c.b16 %v653, %v652
        %v669 = vpack.c.b16 %v655, %v654
        %v670 = vpack.c.b16 %v657, %v656
        %v671 = vpack.c.b16 %v659, %v658
        %v672 = vpack.c.b16 %v661, %v660
        %v673 = vpack.c.b16 %v663, %v662
        %v674 = vpack.c.b16 %v665, %v664
        %v675 = vpack.c.b16 %v667, %v666
        %684 = vmatprep.subr.bf16.mxu0 0
        %685 = vmatpush1.bf16.msra.mxu0 %v675
        %686 = vmatprep.subr.bf16.mxu0 0
        %687 = vmatpush1.bf16.msra.mxu0 %v674
        %688 = vmatprep.subr.bf16.mxu0 0
        %689 = vmatpush1.bf16.msra.mxu0 %v673
        %690 = vmatprep.subr.bf16.mxu0 0
        %691 = vmatpush1.bf16.msra.mxu0 %v672
        %692 = vmatprep.subr.bf16.mxu0 0
        %693 = vmatpush1.bf16.msra.mxu0 %v671
        %694 = vmatprep.subr.bf16.mxu0 0
        %695 = vmatpush1.bf16.msra.mxu0 %v670
        %696 = vmatprep.subr.bf16.mxu0 0
        %697 = vmatpush1.bf16.msra.mxu0 %v669
        %698 = vmatprep.subr.bf16.mxu0 0
        %699 = vmatpush1.bf16.msra.mxu0 %v668
        %700 = vmatprep.subr.bf16.mxu0 0
        %701 = vmatpush2.bf16.msra.mxu0 0
        %702 = vmatprep.subr.bf16.mxu0 0
        %703 = vmatpush2.bf16.msra.mxu0 0
        %704 = vmatprep.subr.bf16.mxu0 0
        %705 = vmatpush2.bf16.msra.mxu0 0
        %706 = vmatprep.subr.bf16.mxu0 0
        %707 = vmatpush2.bf16.msra.mxu0 0
        %708 = vmatprep.subr.bf16.mxu0 0
        %709 = vmatpush2.bf16.msra.mxu0 0
        %710 = vmatprep.subr.bf16.mxu0 0
        %711 = vmatpush2.bf16.msra.mxu0 0
        %712 = vmatprep.subr.bf16.mxu0 0
        %713 = vmatpush2.bf16.msra.mxu0 0
        %714 = vmatprep.subr.bf16.mxu0 0
        %715 = vmatpush2.bf16.msra.mxu0 0
        %716 = vmatprep.mubr.bf16.mxu0 0
        %717 = vmatmul.mubr.bf16.gmra.mxu0 %v612
        %v718 = vpop.f32.mrf.mxu0
        %v719 = vadd.f32 %v634, %v718
        %v720 = vpop.f32.mrf.mxu0
        %v721 = vpop.f32.mrf.mxu0
        %v722 = vadd.f32 %v634, %v721
        %v723 = vpop.f32.mrf.mxu0
        %724 = vdwg.mxu0
        %725 = vst [vmem:[%s271] sm:$0xff] %v719
        %726 = vst [vmem:[%s271 + $0x8] sm:$0xff] %v722
        %s727 = sand.u32 %s141, 1
        %s728 = scalar_lea.sflag [#allocation4], %s727
        %s729 = sand.u32 %s141, 1
        %s730 = smul.addr %s729, 16
        %s731 = scalar_lea.vmem [#allocation8], %s730
        // Predicated region
        $region53: #{tpu_custom_call.1} parent=39 // pred_check
          %p732 = pneg %p151
        $region54: #{tpu_custom_call.1} parent=39 // pred_check_branch
          %734 = sbr.rel (%p732) target = $region56
        $region55: #{tpu_custom_call.1} parent=39 // pred_region
          %s735 = smul.u32 2, %s23
          %s737 = ssub.s32 256, 256
          %738 = vsyncadd %s728, %s737
          %s739 = smul.addr %s735, 128
          %s740 = scalar_lea.hbm %s5, %s739
          %s741 = sshll.u32 %s731, 4
          %s742 = int_to_ptr.vmem [resolvable:$true] %s741
          %747 = dma.vmem_to_hbm [thread:$0]  %s742, 256, %s740, %s728, 128, 128, 8
        $region56: #{tpu_custom_call.1} parent=39 // pred_fallthru
          _
      $region40: #{tpu_custom_call.1} parent=5 // pred_fallthru
        _
      %p748 = scmp.le.s32.totalorder 2, %s18
      // Predicated region
      $region57: #{tpu_custom_call.1} parent=5 // pred_check
        %p749 = pneg %p748
      $region58: #{tpu_custom_call.1} parent=5 // pred_check_branch
        %751 = sbr.rel (%p749) target = $region60
      $region59: #{tpu_custom_call.1} parent=5 // pred_region
        %s752 = ssub.s32 %s18, 2
        // Predicated region
        $region61: #{tpu_custom_call.1} parent=59 // pred_check
          %p753 = pneg %p157
        $region62: #{tpu_custom_call.1} parent=59 // pred_check_branch
          %755 = sbr.rel (%p753) target = $region64
        $region63: #{tpu_custom_call.1} parent=59 // pred_region
          %s756 = sand.u32 %s142, 1
          %s757 = scalar_lea.sflag [#allocation4], %s756
          %s758 = sand.u32 %s142, 1
          %s759 = smul.addr %s758, 16
          %s760 = scalar_lea.vmem [#allocation8], %s759
          %761 = dma.done %s757, 256
        $region64: #{tpu_custom_call.1} parent=59 // pred_fallthru
          _
      $region60: #{tpu_custom_call.1} parent=5 // pred_fallthru
        _
    $region6: #{tpu_custom_call.1} parent=1 // loop_footer
      %s22 = sadd.s32 1, %s18
    $region7: #{tpu_custom_call.1} parent=1 // loop_footer_branch
      %17 = sbr.rel target = $region3
    $region8: #{tpu_custom_call.1} parent=1 // loop_exit
      _
    %762 = vsyncpa [#allocation3], 1
    %s763 = scalar_lea.sflag [#allocation3], 1
    %764 = vsyncpa %s763, 1
    %765 = vsyncpa [#allocation6], 1
    %766 = vsyncpa [#allocation4], 1
    %s767 = scalar_lea.sflag [#allocation4], 1
    %768 = vsyncpa %s767, 1

</llo_original>
